<compile_context>
chip_gen: v7x
topology: tpu7x:2x2x1
jax: 0.10.0
libtpu: 0.0.40
codegen_flags: <defaults>
</compile_context>

<pallas_src>
import jax
import jax.numpy as jnp
import numpy as np
from jax import lax
from jax.experimental import pallas as pl
from jax.experimental.pallas import tpu as pltpu

# Fixed Sobel filter bank from the module's __init__ ([4, 3, 3], no grad, no bias).
SOBEL = (
    ((-1.0, -2.0, -1.0), ( 0.0,  0.0,  0.0), ( 1.0,  2.0,  1.0)),
    ((-1.0,  0.0,  1.0), (-2.0,  0.0,  2.0), (-1.0,  0.0,  1.0)),
    (( 0.0,  1.0,  2.0), (-1.0,  0.0,  1.0), (-2.0, -1.0,  0.0)),
    ((-2.0, -1.0,  0.0), (-1.0,  0.0,  1.0), ( 0.0,  1.0,  2.0)),
)
NUM_K = len(SOBEL)
LANES = 128


def _sobel_kernel(x_ref, halo_ref, o_ref):
    """One (batch, row-tile) grid step.

    x_ref   : (1, TH, W)     unpadded image rows of this tile
    halo_ref: (1, 1, 2, W)   reflect halo rows: [0] = row above tile, [1] = row below
    o_ref   : (1, 4, TH, W)  the four Sobel responses for this tile
    """
    TH = x_ref.shape[1]
    W = x_ref.shape[2]

    # f32 accumulation irrespective of input dtype (matches the f32 reference conv).
    xm = x_ref[0].astype(jnp.float32)            # (TH, W)
    halo = halo_ref[0, 0].astype(jnp.float32)    # (2, W)
    top = halo[0:1, :]                           # image row at tile-row offset -1
    bot = halo[1:2, :]                           # image row at tile-row offset +1

    # Roll (XLU) path for aligned tiles; concatenate fallback for tiny/unaligned
    # ones (the fallback is the previously-validated construction).
    use_roll = (W % LANES == 0) and (TH % 8 == 0)

    # ---- row-shifted windows (reflect handled via the halo rows) -------------
    if use_roll:
        row_id = lax.broadcasted_iota(jnp.int32, (TH, W), 0)
        # roll(x, 1, 0)[i] == x[i-1] (wrap);  roll(x, TH-1, 0)[i] == x[i+1] (wrap)
        r_up = jnp.where(row_id == 0, top, pltpu.roll(xm, 1, 0))
        r_dn = jnp.where(row_id == TH - 1, bot, pltpu.roll(xm, TH - 1, 0))
    else:
        r_up = jnp.concatenate([top, xm[: TH - 1, :]], axis=0)   # row offset -1
        r_dn = jnp.concatenate([xm[1:, :], bot], axis=0)         # row offset +1

    # ---- separable intermediates shared by all four filters ------------------
    d = r_dn - r_up              # vertical gradient   [-1, 0, 1]^T
    s = r_up + r_dn
    smooth = s + 2.0 * xm        # vertical smoothing  [ 1, 2, 1]^T   (for Gx)
    rowbox = s + xm              # vertical box        [ 1, 1, 1]^T   (diagonals)

    # ---- +-1 column shifts (reflect at the true image edge) ------------------
    if use_roll:
        lane_id = lax.broadcasted_iota(jnp.int32, (TH, W), 1)
        left_edge = lane_id == 0
        right_edge = lane_id == W - 1

        def shift_lr(a):
            rp = pltpu.roll(a, 1, 1)       # a[j-1] with wrap
            rm = pltpu.roll(a, W - 1, 1)   # a[j+1] with wrap
            a_l = jnp.where(left_edge, rm, rp)    # reflect(-1) -> column 1
            a_r = jnp.where(right_edge, rp, rm)   # reflect(W)  -> column W-2
            return a_l, a_r
    else:
        def shift_lr(a):
            a_l = jnp.concatenate([a[:, 1:2], a[:, : W - 1]], axis=1)
            a_r = jnp.concatenate([a[:, 1:], a[:, W - 2:W - 1]], axis=1)
            return a_l, a_r

    d_l, d_r = shift_lr(d)
    sm_l, sm_r = shift_lr(smooth)
    rb_l, rb_r = shift_lr(rowbox)

    u = d_l + d + d_r            # [1,1,1] column box of the vertical gradient
    v = rb_r - rb_l              # column gradient of the vertical box

    o_ref[0, 0, :, :] = (u + d).astype(o_ref.dtype)        # SOBEL[0]: Gy = dL + 2d + dR
    o_ref[0, 1, :, :] = (sm_r - sm_l).astype(o_ref.dtype)  # SOBEL[1]: Gx
    o_ref[0, 2, :, :] = (v - u).astype(o_ref.dtype)        # SOBEL[2]: anti-diagonal
    o_ref[0, 3, :, :] = (v + u).astype(o_ref.dtype)        # SOBEL[3]: diagonal


def _pick_tile_h(H, W, itemsize, n_batch, vmem_budget_bytes=12 * 1024 * 1024):
    """Largest row tile that (a) divides H, (b) is a multiple of 8 (or == H),
    (c) keeps the VMEM working set under budget INCLUDING the in-kernel f32
    temporaries, and (d) leaves >= 2 grid steps at batch 1 (v7x's 2 TCs)."""
    io_per_row = 2 * (1 + NUM_K) * W * itemsize     # double-buffered in + out rows
    tmp_per_row = 10 * W * 4                        # xm cast, rolls, d/smooth/rowbox,
    per_row = io_per_row + tmp_per_row              # L/R shifts, u/v (f32, single-buf)
    max_th = max(8, vmem_budget_bytes // per_row)
    if n_batch < 2 and H >= 16:
        max_th = min(max_th, H // 2)                # keep >= 2 grid steps for v7x
    if H <= max_th:
        return H
    for th in range(min(H, max_th), 7, -1):
        if H % th == 0 and th % 8 == 0:
            return th
    # TODO(synk): add a W-split grid axis / masked last tile for huge frames with
    # awkward H; the full-height fallback may exceed the scoped-VMEM budget there.
    return H


def sobel_block(x, *, tile_h=None):
    """x: (N, 1, H, W) -> (N, 4, H, W); == Conv2d(1, 4, 3, padding=1, reflect, bias=False)."""
    N, C, H, W = x.shape
    assert C == 1, "SobelBlock expects a single input channel"
    assert H >= 2 and W >= 2, "reflect padding requires H >= 2 and W >= 2"

    x2 = x[:, 0]  # (N, H, W); contiguous squeeze, no HBM copy

    # Lane-dense output stores: pad W to a multiple of 128 when the relative
    # overhead is small (W > 128).  Column W is set to the reflect value so the
    # last real output column stays exact; padded columns are cropped afterwards.
    if W > LANES and W % LANES != 0:
        w_pad = pl.cdiv(W, LANES) * LANES
        reflect_col = x2[:, :, W - 2:W - 1]
        zeros = jnp.zeros((N, H, w_pad - W - 1), x.dtype)
        x2 = jnp.concatenate([x2, reflect_col, zeros], axis=-1)
    else:
        w_pad = W

    if tile_h is None:
        tile_h = _pick_tile_h(H, w_pad, jnp.dtype(x.dtype).itemsize, N)
    TH = int(tile_h)
    assert H % TH == 0, "tile_h must divide H"
    assert TH == H or TH % 8 == 0, "tile_h must be a multiple of 8 (or equal H)"
    nt = H // TH

    # Reflect halo rows for every tile, gathered once in the wrapper (2 rows per
    # tile of extra read traffic); the full (H+2)x(W+2) padded frame never exists.
    tile_ids = np.arange(nt)
    top_idx = np.abs(tile_ids * TH - 1)                          # reflect(t*TH - 1)
    bot_idx = (H - 1) - np.abs((H - 1) - (tile_ids + 1) * TH)    # reflect((t+1)*TH)
    halo_idx = np.stack([top_idx, bot_idx], axis=1).astype(np.int32)  # (nt, 2)
    halos = x2[:, halo_idx, :]                                   # (N, nt, 2, w_pad)

    out = pl.pallas_call(
        _sobel_kernel,
        out_shape=jax.ShapeDtypeStruct((N, NUM_K, H, w_pad), x.dtype),
        grid_spec=pltpu.PrefetchScalarGridSpec(
            num_scalar_prefetch=0,
            grid=(N, nt),
            in_specs=[
                pl.BlockSpec((1, TH, w_pad), lambda n, t: (n, t, 0)),
                pl.BlockSpec((1, 1, 2, w_pad), lambda n, t: (n, t, 0, 0)),
            ],
            out_specs=pl.BlockSpec((1, NUM_K, TH, w_pad), lambda n, t: (n, 0, t, 0)),
        ),
        compiler_params=pltpu.CompilerParams(
            # Each output tile is written exactly once -> both axes independent.
            dimension_semantics=("parallel", "parallel"),
            vmem_limit_bytes=32 * 1024 * 1024,
        ),
    )(x2, halos)

    return out[..., :W] if w_pad != W else out


def _reference(x):
    """Pure-JAX reference of the PyTorch forward (reflect-padded conv, no bias)."""
    w = jnp.asarray(SOBEL, jnp.float32)[:, None, :, :]  # (4, 1, 3, 3) OIHW
    xp = jnp.pad(x, ((0, 0), (0, 0), (1, 1), (1, 1)), mode="reflect")
    return lax.conv_general_dilated(
        xp, w, window_strides=(1, 1), padding="VALID",
        dimension_numbers=("NCHW", "OIHW", "NCHW"),
    ).astype(x.dtype)


if __name__ == "__main__":
    key = jax.random.PRNGKey(0)

    # Module-consistent small case (Conv2d(1, 4, ...) => single input channel).
    x = jax.random.normal(key, (2, 1, 16, 16), dtype=jnp.float32)
    out = jax.block_until_ready(sobel_block(x))
    ref = jax.block_until_ready(_reference(x))
    np.testing.assert_allclose(np.asarray(out), np.asarray(ref), rtol=1e-5, atol=1e-5)

    # Row-tiled, lane-aligned (roll) path: 4 row tiles of 8 on a 128-lane image.
    x_t = jax.random.normal(jax.random.PRNGKey(1), (1, 1, 32, 128), dtype=jnp.float32)
    out_t = jax.block_until_ready(sobel_block(x_t, tile_h=8))
    ref_t = jax.block_until_ready(_reference(x_t))
    np.testing.assert_allclose(np.asarray(out_t), np.asarray(ref_t), rtol=1e-5, atol=1e-5)

    # Lane-padding path: W=192 is padded to 256 in the wrapper, then cropped.
    x_p = jax.random.normal(jax.random.PRNGKey(2), (1, 1, 16, 192), dtype=jnp.float32)
    out_p = jax.block_until_ready(sobel_block(x_p))
    ref_p = jax.block_until_ready(_reference(x_p))
    np.testing.assert_allclose(np.asarray(out_p), np.asarray(ref_p), rtol=1e-5, atol=1e-5)

    print("KERNEL_OK")
</pallas_src>

<mosaic_0001>
module attributes {stable_mosaic.version = 11 : i64} {
  func.func @_sobel_kernel(%arg0: i32, %arg1: i32, %arg2: memref<1x16x16xf32, #tpu.memory_space<vmem>>, %arg3: memref<1x1x2x16xf32, #tpu.memory_space<vmem>>, %arg4: memref<1x4x16x16xf32, #tpu.memory_space<vmem>>) attributes {dimension_semantics = [#tpu.dimension_semantics<parallel>, #tpu.dimension_semantics<parallel>], iteration_bounds = array<i64: 2, 1>, scalar_prefetch = 0 : i64, scratch_operands = 0 : i64, tpu.core_type = #tpu.core_type<tc>, window_params = [{transform_indices = @transform_0, window_bounds = array<i64: 1, 16, 16>}, {transform_indices = @transform_1, window_bounds = array<i64: 1, 1, 2, 16>}, {transform_indices = @transform_2, window_bounds = array<i64: 1, 4, 16, 16>}]} {
    %c0 = arith.constant 0 : index
    %c0_0 = arith.constant 0 : index
    %c0_1 = arith.constant 0 : index
    %0 = vector.load %arg2[%c0, %c0_0, %c0_1] : memref<1x16x16xf32, #tpu.memory_space<vmem>>, vector<1x16x16xf32>
    %1 = vector.shape_cast %0 : vector<1x16x16xf32> to vector<16x16xf32>
    %c0_2 = arith.constant 0 : index
    %c0_3 = arith.constant 0 : index
    %c0_4 = arith.constant 0 : index
    %c0_5 = arith.constant 0 : index
    %2 = vector.load %arg3[%c0_2, %c0_3, %c0_4, %c0_5] : memref<1x1x2x16xf32, #tpu.memory_space<vmem>>, vector<1x1x2x16xf32>
    %3 = vector.shape_cast %2 : vector<1x1x2x16xf32> to vector<2x16xf32>
    %4 = vector.extract_strided_slice %3 {offsets = [0, 0], sizes = [1, 16], strides = [1, 1]} : vector<2x16xf32> to vector<1x16xf32>
    %5 = vector.extract_strided_slice %3 {offsets = [1, 0], sizes = [1, 16], strides = [1, 1]} : vector<2x16xf32> to vector<1x16xf32>
    %6 = vector.extract_strided_slice %1 {offsets = [0, 0], sizes = [15, 16], strides = [1, 1]} : vector<16x16xf32> to vector<15x16xf32>
    %7 = tpu.concatenate %4, %6 in 0 : vector<1x16xf32>, vector<15x16xf32> -> vector<16x16xf32>
    %8 = vector.extract_strided_slice %1 {offsets = [1, 0], sizes = [15, 16], strides = [1, 1]} : vector<16x16xf32> to vector<15x16xf32>
    %9 = tpu.concatenate %8, %5 in 0 : vector<15x16xf32>, vector<1x16xf32> -> vector<16x16xf32>
    %10 = arith.subf %9, %7 : vector<16x16xf32>
    %11 = arith.addf %7, %9 : vector<16x16xf32>
    %cst = arith.constant 2.000000e+00 : f32
    %12 = vector.broadcast %cst : f32 to vector<16x16xf32>
    %13 = arith.mulf %12, %1 : vector<16x16xf32>
    %14 = arith.addf %11, %13 : vector<16x16xf32>
    %15 = arith.addf %11, %1 : vector<16x16xf32>
    %16 = vector.extract_strided_slice %10 {offsets = [0, 1], sizes = [16, 1], strides = [1, 1]} : vector<16x16xf32> to vector<16x1xf32>
    %17 = vector.extract_strided_slice %10 {offsets = [0, 0], sizes = [16, 15], strides = [1, 1]} : vector<16x16xf32> to vector<16x15xf32>
    %18 = tpu.concatenate %16, %17 in 1 : vector<16x1xf32>, vector<16x15xf32> -> vector<16x16xf32>
    %19 = vector.extract_strided_slice %10 {offsets = [0, 1], sizes = [16, 15], strides = [1, 1]} : vector<16x16xf32> to vector<16x15xf32>
    %20 = vector.extract_strided_slice %10 {offsets = [0, 14], sizes = [16, 1], strides = [1, 1]} : vector<16x16xf32> to vector<16x1xf32>
    %21 = tpu.concatenate %19, %20 in 1 : vector<16x15xf32>, vector<16x1xf32> -> vector<16x16xf32>
    %22 = vector.extract_strided_slice %14 {offsets = [0, 1], sizes = [16, 1], strides = [1, 1]} : vector<16x16xf32> to vector<16x1xf32>
    %23 = vector.extract_strided_slice %14 {offsets = [0, 0], sizes = [16, 15], strides = [1, 1]} : vector<16x16xf32> to vector<16x15xf32>
    %24 = tpu.concatenate %22, %23 in 1 : vector<16x1xf32>, vector<16x15xf32> -> vector<16x16xf32>
    %25 = vector.extract_strided_slice %14 {offsets = [0, 1], sizes = [16, 15], strides = [1, 1]} : vector<16x16xf32> to vector<16x15xf32>
    %26 = vector.extract_strided_slice %14 {offsets = [0, 14], sizes = [16, 1], strides = [1, 1]} : vector<16x16xf32> to vector<16x1xf32>
    %27 = tpu.concatenate %25, %26 in 1 : vector<16x15xf32>, vector<16x1xf32> -> vector<16x16xf32>
    %28 = vector.extract_strided_slice %15 {offsets = [0, 1], sizes = [16, 1], strides = [1, 1]} : vector<16x16xf32> to vector<16x1xf32>
    %29 = vector.extract_strided_slice %15 {offsets = [0, 0], sizes = [16, 15], strides = [1, 1]} : vector<16x16xf32> to vector<16x15xf32>
    %30 = tpu.concatenate %28, %29 in 1 : vector<16x1xf32>, vector<16x15xf32> -> vector<16x16xf32>
    %31 = vector.extract_strided_slice %15 {offsets = [0, 1], sizes = [16, 15], strides = [1, 1]} : vector<16x16xf32> to vector<16x15xf32>
    %32 = vector.extract_strided_slice %15 {offsets = [0, 14], sizes = [16, 1], strides = [1, 1]} : vector<16x16xf32> to vector<16x1xf32>
    %33 = tpu.concatenate %31, %32 in 1 : vector<16x15xf32>, vector<16x1xf32> -> vector<16x16xf32>
    %34 = arith.addf %18, %10 : vector<16x16xf32>
    %35 = arith.addf %34, %21 : vector<16x16xf32>
    %36 = arith.subf %33, %30 : vector<16x16xf32>
    %37 = arith.addf %35, %10 : vector<16x16xf32>
    %c0_6 = arith.constant 0 : index
    %c0_7 = arith.constant 0 : index
    %c0_8 = arith.constant 0 : index
    %c0_9 = arith.constant 0 : index
    %38 = vector.load %arg4[%c0_6, %c0_7, %c0_8, %c0_9] : memref<1x4x16x16xf32, #tpu.memory_space<vmem>>, vector<1x1x16x16xf32>
    %39 = vector.shape_cast %38 : vector<1x1x16x16xf32> to vector<16x16xf32>
    %40 = vector.shape_cast %37 : vector<16x16xf32> to vector<1x1x16x16xf32>
    tpu.vector_store %arg4[%c0_6, %c0_7, %c0_8, %c0_9], %40 {strides = array<i32>} : memref<1x4x16x16xf32, #tpu.memory_space<vmem>>, vector<1x1x16x16xf32>,
    %41 = arith.subf %27, %24 : vector<16x16xf32>
    %c0_10 = arith.constant 0 : index
    %c1 = arith.constant 1 : index
    %c0_11 = arith.constant 0 : index
    %c0_12 = arith.constant 0 : index
    %42 = vector.load %arg4[%c0_10, %c1, %c0_11, %c0_12] : memref<1x4x16x16xf32, #tpu.memory_space<vmem>>, vector<1x1x16x16xf32>
    %43 = vector.shape_cast %42 : vector<1x1x16x16xf32> to vector<16x16xf32>
    %44 = vector.shape_cast %41 : vector<16x16xf32> to vector<1x1x16x16xf32>
    tpu.vector_store %arg4[%c0_10, %c1, %c0_11, %c0_12], %44 {strides = array<i32>} : memref<1x4x16x16xf32, #tpu.memory_space<vmem>>, vector<1x1x16x16xf32>,
    %45 = arith.subf %36, %35 : vector<16x16xf32>
    %c0_13 = arith.constant 0 : index
    %c2 = arith.constant 2 : index
    %c0_14 = arith.constant 0 : index
    %c0_15 = arith.constant 0 : index
    %46 = vector.load %arg4[%c0_13, %c2, %c0_14, %c0_15] : memref<1x4x16x16xf32, #tpu.memory_space<vmem>>, vector<1x1x16x16xf32>
    %47 = vector.shape_cast %46 : vector<1x1x16x16xf32> to vector<16x16xf32>
    %48 = vector.shape_cast %45 : vector<16x16xf32> to vector<1x1x16x16xf32>
    tpu.vector_store %arg4[%c0_13, %c2, %c0_14, %c0_15], %48 {strides = array<i32>} : memref<1x4x16x16xf32, #tpu.memory_space<vmem>>, vector<1x1x16x16xf32>,
    %49 = arith.addf %36, %35 : vector<16x16xf32>
    %c0_16 = arith.constant 0 : index
    %c3 = arith.constant 3 : index
    %c0_17 = arith.constant 0 : index
    %c0_18 = arith.constant 0 : index
    %50 = vector.load %arg4[%c0_16, %c3, %c0_17, %c0_18] : memref<1x4x16x16xf32, #tpu.memory_space<vmem>>, vector<1x1x16x16xf32>
    %51 = vector.shape_cast %50 : vector<1x1x16x16xf32> to vector<16x16xf32>
    %52 = vector.shape_cast %49 : vector<16x16xf32> to vector<1x1x16x16xf32>
    tpu.vector_store %arg4[%c0_16, %c3, %c0_17, %c0_18], %52 {strides = array<i32>} : memref<1x4x16x16xf32, #tpu.memory_space<vmem>>, vector<1x1x16x16xf32>,
    return
  }
  func.func @transform_0(%arg0: i32, %arg1: i32) -> (i32, i32, i32) {
    %c0_i32 = arith.constant 0 : i32
    %c0_i32_0 = arith.constant 0 : i32
    return %arg0, %arg1, %c0_i32 : i32, i32, i32
  }
  func.func @transform_1(%arg0: i32, %arg1: i32) -> (i32, i32, i32, i32) {
    %c0_i32 = arith.constant 0 : i32
    %c0_i32_0 = arith.constant 0 : i32
    %c0_i32_1 = arith.constant 0 : i32
    return %arg0, %arg1, %c0_i32, %c0_i32_0 : i32, i32, i32, i32
  }
  func.func @transform_2(%arg0: i32, %arg1: i32) -> (i32, i32, i32, i32) {
    %c0_i32 = arith.constant 0 : i32
    %c0_i32_0 = arith.constant 0 : i32
    %c0_i32_1 = arith.constant 0 : i32
    return %arg0, %c0_i32, %arg1, %c0_i32_0 : i32, i32, i32, i32
  }
}

</mosaic_0001>

<llo_original>
// kernel: tpu_custom_call.1
$region0: #{tpu_custom_call.1}
  #allocation0 [shape = 'u32[]', space=smem, size = 0x4, offset = 0x4, fixed_abs, tag = 'smem constant byte address 0x4 - core index']
  #allocation1 [shape = 'u32[144,128]{1,0:T(1,128)}', space=vmem, size = 0x12000, scoped, tag = 'internal scratch']
  %s0 = inlined_call_operand.hbm [shape: f32[2,16,16], index: 0, kind: input, shape index: {}]
  %s1 = inlined_call_operand.hbm [shape: f32[2,1,2,16], index: 1, kind: input, shape index: {}]
  %s2 = inlined_call_operand.hbm [shape: f32[2,4,16,16], index: 2, kind: output, shape index: {}]
  %s3 = sld [smem:[#allocation0]]
  $region49: #{tpu_custom_call.1} parent=0
    _
  %s5 = ssub.s32 1, %s3
  %s6 = scalar_select 0, %s5, %s3
  $region1: #{tpu_custom_call.1} parent=0
    #allocation2 [shape = 'u8[16384]{0}', space=vmem, size = 0x4000, scoped, tag = 'input window, operand 0']
    #allocation3 [shape = 's32[2]{0}', space=sflag, size = 0x8, scoped, tag = 'scoped memory for tpu_custom_call.1']
    #allocation4 [shape = 's32[2]{0}', space=sflag, size = 0x8, scoped, tag = 'scoped memory for tpu_custom_call.1']
    #allocation5 [shape = 'u8[2048]{0}', space=vmem, size = 0x800, scoped, tag = 'input window, operand 1']
    #allocation6 [shape = 's32[2]{0}', space=sflag, size = 0x8, scoped, tag = 'scoped memory for tpu_custom_call.1']
    #allocation7 [shape = 'u8[65536]{0}', space=vmem, size = 0x10000, scoped, tag = 'output window, operand 0']
    %7 = vsyncpa [#allocation3], 0
    %s8 = scalar_lea.sflag [#allocation3], 1
    %9 = vsyncpa %s8, 0
    %10 = vsyncpa [#allocation6], 0
    %s11 = scalar_lea.sflag [#allocation6], 1
    %12 = vsyncpa %s11, 0
    %13 = vsyncpa [#allocation4], 0
    %s14 = scalar_lea.sflag [#allocation4], 1
    %15 = vsyncpa %s14, 0
    loop: start=0, step=1, limit=4
    $region2: #{tpu_custom_call.1} parent=1 // loop_pre_header
      _
    $region3: #{tpu_custom_call.1} parent=1 // loop_header
      %s17 = sphi 0, %s21
      %p18 = scmp.ge.s32.totalorder %s17, 4
      %s24 = sphi 0, %s36
      %s25 = sphi 0, %s32
      %s26 = sphi 0, %s24
      %s27 = sphi 0, %s25
      %s28 = sphi 0, %s26
      %s29 = sphi 0, %s27
      %s41 = sphi 0, %s43
      %s44 = sphi 0, %s41
      %s45 = sphi 0, %s44
      %s61 = sphi 0, %s45
      %s69 = sphi 0, %s71
      %s72 = sphi 0, %s69
      %s73 = sphi 0, %s72
      %s89 = sphi 0, %s73
      %s97 = sphi 0, %s99
      %s100 = sphi 0, %s97
      %s101 = sphi 0, %s100
      %s117 = sphi 0, %s101
    $region4: #{tpu_custom_call.1} parent=1 // loop_header_branch
      %20 = sbr.rel (%p18) target = $region8
    $region5: #{tpu_custom_call.1} parent=1 // loop_body
      %s22 = ssub.s32 %s17, 1
      %s23 = ssub.s32 %s17, 2
      %s30 = sadd.s32 1, %s25
      %p31 = scmp.ge.s32.totalorder %s30, 1
      %s32 = scalar_select %p31, 0, %s30
      %s33 = sadd.s32 1, %s24
      %s34 = scalar_select %p31, %s33, %s24
      %p35 = scmp.ge.s32.totalorder %s34, 2
      %s36 = scalar_select %p35, 0, %s34
      %s37 = ssub.s32 %s24, %s36
      %s38 = ssub.s32 %s25, %s32
      %s39 = sor.u32 %s37, %s38
      %p40 = scmp.eq.s32.totalorder %s39, 0
      %s42 = sadd.s32 %s41, 1
      %s43 = scalar_select %p40, %s41, %s42
      %p46 = pneg %p40
      %p47 = scmp.eq.s32.totalorder %s17, 1
      %p48 = por %p46, %p47
      %p49 = scmp.ne.s32.totalorder %s41, %s44
      %p50 = scmp.eq.s32.totalorder %s17, 0
      %p51 = por %p49, %p50
      %p52 = scmp.ne.s32.totalorder %s41, %s44
      %p53 = scmp.eq.s32.totalorder %s22, 1
      %p54 = por %p52, %p53
      %p55 = scmp.ne.s32.totalorder %s44, %s45
      %p56 = scmp.eq.s32.totalorder %s22, 0
      %p57 = por %p55, %p56
      %p58 = scmp.ne.s32.totalorder %s44, %s45
      %p59 = scmp.eq.s32.totalorder %s23, 1
      %p60 = por %p58, %p59
      %p62 = scmp.ne.s32.totalorder %s45, %s61
      %p63 = scmp.eq.s32.totalorder %s23, 0
      %p64 = por %p62, %p63
      %s65 = ssub.s32 %s24, %s36
      %s66 = ssub.s32 %s25, %s32
      %s67 = sor.u32 %s65, %s66
      %p68 = scmp.eq.s32.totalorder %s67, 0
      %s70 = sadd.s32 %s69, 1
      %s71 = scalar_select %p68, %s69, %s70
      %p74 = pneg %p68
      %p75 = scmp.eq.s32.totalorder %s17, 1
      %p76 = por %p74, %p75
      %p77 = scmp.ne.s32.totalorder %s69, %s72
      %p78 = scmp.eq.s32.totalorder %s17, 0
      %p79 = por %p77, %p78
      %p80 = scmp.ne.s32.totalorder %s69, %s72
      %p81 = scmp.eq.s32.totalorder %s22, 1
      %p82 = por %p80, %p81
      %p83 = scmp.ne.s32.totalorder %s72, %s73
      %p84 = scmp.eq.s32.totalorder %s22, 0
      %p85 = por %p83, %p84
      %p86 = scmp.ne.s32.totalorder %s72, %s73
      %p87 = scmp.eq.s32.totalorder %s23, 1
      %p88 = por %p86, %p87
      %p90 = scmp.ne.s32.totalorder %s73, %s89
      %p91 = scmp.eq.s32.totalorder %s23, 0
      %p92 = por %p90, %p91
      %s93 = ssub.s32 %s24, %s36
      %s94 = ssub.s32 %s25, %s32
      %s95 = sor.u32 %s93, %s94
      %p96 = scmp.eq.s32.totalorder %s95, 0
      %s98 = sadd.s32 %s97, 1
      %s99 = scalar_select %p96, %s97, %s98
      %p102 = pneg %p96
      %p103 = scmp.eq.s32.totalorder %s17, 1
      %p104 = por %p102, %p103
      %p105 = scmp.ne.s32.totalorder %s97, %s100
      %p106 = scmp.eq.s32.totalorder %s17, 0
      %p107 = por %p105, %p106
      %p108 = scmp.ne.s32.totalorder %s97, %s100
      %p109 = scmp.eq.s32.totalorder %s22, 1
      %p110 = por %p108, %p109
      %p111 = scmp.ne.s32.totalorder %s100, %s101
      %p112 = scmp.eq.s32.totalorder %s22, 0
      %p113 = por %p111, %p112
      %p114 = scmp.ne.s32.totalorder %s100, %s101
      %p115 = scmp.eq.s32.totalorder %s23, 1
      %p116 = por %p114, %p115
      %p118 = scmp.ne.s32.totalorder %s101, %s117
      %p119 = scmp.eq.s32.totalorder %s23, 0
      %p120 = por %p118, %p119
      %p121 = scmp.le.s32.totalorder 1, %s17
      %p122 = scmp.lt.s32.totalorder %s17, 3
      %p123 = pnand %p121, %p122
      %p124 = pneg %p123
      // Predicated region
      $region9: #{tpu_custom_call.1} parent=5 // pred_check
        _
      $region10: #{tpu_custom_call.1} parent=5 // pred_check_branch
        %126 = sbr.rel (%p123) target = $region12
      $region11: #{tpu_custom_call.1} parent=5 // pred_region
        %s127 = ssub.s32 %s17, 1
      $region12: #{tpu_custom_call.1} parent=5 // pred_fallthru
        _
      %p128 = scmp.lt.s32.totalorder %s17, 2
      // Predicated region
      $region13: #{tpu_custom_call.1} parent=5 // pred_check
        %p129 = pneg %p128
      $region14: #{tpu_custom_call.1} parent=5 // pred_check_branch
        %131 = sbr.rel (%p129) target = $region16
      $region15: #{tpu_custom_call.1} parent=5 // pred_region
        // Predicated region
        $region17: #{tpu_custom_call.1} parent=15 // pred_check
          %p132 = pneg %p51
        $region18: #{tpu_custom_call.1} parent=15 // pred_check_branch
          %134 = sbr.rel (%p132) target = $region20
        $region19: #{tpu_custom_call.1} parent=15 // pred_region
          %s135 = sand.u32 %s41, 1
          %s136 = scalar_lea.sflag [#allocation3], %s135
          %s137 = sand.u32 %s41, 1
          %s138 = smul.addr %s137, 16
          %s139 = scalar_lea.vmem [#allocation2], %s138
          %s140 = smul.u32 2, %s25
          %s142 = ssub.s32 256, 256
          %143 = vsyncadd %s136, %s142
          %s144 = smul.addr %s24, 2
          %s145 = sadd.s32 %s140, %s144
          %s146 = smul.addr %s145, 128
          %s147 = scalar_lea.hbm %s0, %s146
          %s148 = sshll.u32 %s139, 4
          %s149 = int_to_ptr.vmem [resolvable:$true] %s148
          %154 = dma.hbm_to_vmem [thread:$0]  %s147, 256, %s149, %s136, 128, 128, 8
        $region20: #{tpu_custom_call.1} parent=15 // pred_fallthru
          _
        // Predicated region
        $region21: #{tpu_custom_call.1} parent=15 // pred_check
          %p155 = pneg %p79
        $region22: #{tpu_custom_call.1} parent=15 // pred_check_branch
          %157 = sbr.rel (%p155) target = $region24
        $region23: #{tpu_custom_call.1} parent=15 // pred_region
          %s158 = sand.u32 %s69, 1
          %s159 = scalar_lea.sflag [#allocation6], %s158
          %s160 = sand.u32 %s69, 1
          %s161 = smul.addr %s160, 2
          %s162 = scalar_lea.vmem [#allocation5], %s161
          %s164 = ssub.s32 32, 32
          %165 = vsyncadd %s159, %s164
          %s166 = sadd.s32 %s25, %s24
          %s167 = smul.addr %s166, 32
          %s168 = scalar_lea.hbm %s1, %s167
          %s170 = sshll.u32 %s162, 4
          %s171 = int_to_ptr.vmem [resolvable:$true] %s170
          %173 = dma.hbm_to_vmem [thread:$0]  %s168, 32, %s171, %s159
        $region24: #{tpu_custom_call.1} parent=15 // pred_fallthru
          _
      $region16: #{tpu_custom_call.1} parent=5 // pred_fallthru
        _
      %p174 = scmp.le.s32.totalorder 1, %s17
      %p175 = scmp.lt.s32.totalorder %s17, 3
      %p176 = pnand %p174, %p175
      %p177 = pneg %p176
      // Predicated region
      $region25: #{tpu_custom_call.1} parent=5 // pred_check
        _
      $region26: #{tpu_custom_call.1} parent=5 // pred_check_branch
        %179 = sbr.rel (%p176) target = $region28
      $region27: #{tpu_custom_call.1} parent=5 // pred_region
        %s180 = ssub.s32 %s17, 1
        %s181 = sand.u32 %s44, 1
        %s182 = scalar_lea.sflag [#allocation3], %s181
        %s183 = sand.u32 %s44, 1
        %s184 = smul.addr %s183, 16
        %s185 = scalar_lea.vmem [#allocation2], %s184
        // Predicated region
        $region29: #{tpu_custom_call.1} parent=27 // pred_check
          %p186 = pneg %p57
        $region30: #{tpu_custom_call.1} parent=27 // pred_check_branch
          %188 = sbr.rel (%p186) target = $region32
        $region31: #{tpu_custom_call.1} parent=27 // pred_region
          %189 = dma.done %s182, 256
        $region32: #{tpu_custom_call.1} parent=27 // pred_fallthru
          _
        %s190 = sand.u32 %s72, 1
        %s191 = scalar_lea.sflag [#allocation6], %s190
        %s192 = sand.u32 %s72, 1
        %s193 = smul.addr %s192, 2
        %s194 = scalar_lea.vmem [#allocation5], %s193
        // Predicated region
        $region33: #{tpu_custom_call.1} parent=27 // pred_check
          %p195 = pneg %p85
        $region34: #{tpu_custom_call.1} parent=27 // pred_check_branch
          %197 = sbr.rel (%p195) target = $region36
        $region35: #{tpu_custom_call.1} parent=27 // pred_region
          %198 = dma.done %s191, 32
        $region36: #{tpu_custom_call.1} parent=27 // pred_fallthru
          _
        %s199 = sand.u32 %s44, 1
        %s200 = scalar_lea.sflag [#allocation3], %s199
        %s201 = sand.u32 %s44, 1
        %s202 = smul.addr %s201, 16
        %s203 = scalar_lea.vmem [#allocation2], %s202
        %p204 = pneg %p57
        %p205 = pneg %p54
        %s206 = sand.u32 %s72, 1
        %s207 = scalar_lea.sflag [#allocation6], %s206
        %s208 = sand.u32 %s72, 1
        %s209 = smul.addr %s208, 2
        %s210 = scalar_lea.vmem [#allocation5], %s209
        %p211 = pneg %p85
        %p212 = pneg %p82
        %p213 = pneg %p113
        %p214 = pneg %p110
        %s215 = sand.u32 %s100, 1
        %s216 = scalar_lea.sflag [#allocation4], %s215
        %s217 = sand.u32 %s100, 1
        %s218 = smul.addr %s217, 64
        %s219 = scalar_lea.vmem [#allocation7], %s218
        %s220 = smul.u32 2, %s27
        %s221 = smul.u32 2, %s27
        %v222 = vld [vmem:[%s185] sm:$0xff]
        %v223 = vld [vmem:[%s185 + $0x8] sm:$0xff]
        %v224 = vld [vmem:[%s194] sm:$0x3]
        %vm227 = vcmask 1040384
        %v228 = vrot.slane %v222, 7
        %v229 = vrot.slane %v223, 7
        %v230 = vsel %vm227, %v228, %v229
        %v233 = vsel %vm227, %v224, %v228
        %vm234 = vcmask 1046528
        %v235 = vrot.slane %v222, 1
        %v236 = vrot.slane %v223, 1
        %v237 = vsel %vm234, %v235, %v236
        %v241 = vrot.slane %v224, 2
        %v243 = vsel %vm234, %v236, %v241
        %v244 = vsub.f32 %v237, %v233
        %v245 = vsub.f32 %v243, %v230
        %v246 = vadd.f32 %v233, %v237
        %v247 = vadd.f32 %v230, %v243
        %v248 = vmul.f32 %v222, 2.0
        %v249 = vmul.f32 %v223, 2.0
        %v250 = vadd.f32 %v246, %v248
        %v251 = vadd.f32 %v247, %v249
        %v252 = vadd.f32 %v246, %v222
        %v253 = vadd.f32 %v247, %v223
        %256 = vrot.lane.b32.xlu0 %v244, 127
        %v257 = vpop.permute.xlu0 %256
        %258 = vrot.lane.b32.xlu0 %v245, 127
        %v259 = vpop.permute.xlu0 %258
        %262 = vrot.lane.b32.xlu0 %v244, 1
        %v263 = vpop.permute.xlu0 %262
        %264 = vrot.lane.b32.xlu0 %v245, 1
        %v265 = vpop.permute.xlu0 %264
        %vm268 = vcmask 7168
        %v269 = vsel %vm268, %v257, %v263
        %v270 = vsel %vm268, %v259, %v265
        %vm271 = vcmask 121856
        %v272 = vsel %vm271, %v257, %v263
        %v273 = vsel %vm271, %v259, %v265
        %276 = vrot.lane.b32.xlu0 %v250, 127
        %v277 = vpop.permute.xlu0 %276
        %278 = vrot.lane.b32.xlu0 %v251, 127
        %v279 = vpop.permute.xlu0 %278
        %282 = vrot.lane.b32.xlu0 %v250, 1
        %v283 = vpop.permute.xlu0 %282
        %284 = vrot.lane.b32.xlu0 %v251, 1
        %v285 = vpop.permute.xlu0 %284
        %v288 = vsel %vm268, %v277, %v283
        %v289 = vsel %vm268, %v279, %v285
        %v290 = vsel %vm271, %v277, %v283
        %v291 = vsel %vm271, %v279, %v285
        %294 = vrot.lane.b32.xlu0 %v252, 127
        %v295 = vpop.permute.xlu0 %294
        %296 = vrot.lane.b32.xlu0 %v253, 127
        %v297 = vpop.permute.xlu0 %296
        %300 = vrot.lane.b32.xlu0 %v252, 1
        %v301 = vpop.permute.xlu0 %300
        %302 = vrot.lane.b32.xlu0 %v253, 1
        %v303 = vpop.permute.xlu0 %302
        %v306 = vsel %vm268, %v295, %v301
        %v307 = vsel %vm268, %v297, %v303
        %v308 = vsel %vm271, %v295, %v301
        %v309 = vsel %vm271, %v297, %v303
        %v310 = vadd.f32 %v269, %v244
        %v311 = vadd.f32 %v270, %v245
        %v312 = vadd.f32 %v310, %v272
        %v313 = vadd.f32 %v311, %v273
        %v314 = vsub.f32 %v308, %v306
        %v315 = vsub.f32 %v309, %v307
        %v316 = vadd.f32 %v312, %v244
        %v317 = vadd.f32 %v313, %v245
        %vm318 = vcmask 130048
        %319 = vst.msk [vmem:[%s219] sm:$0xff] %vm318, %v316
        %320 = vst.msk [vmem:[%s219 + $0x8] sm:$0xff] %vm318, %v317
        %v321 = vsub.f32 %v290, %v288
        %v322 = vsub.f32 %v291, %v289
        %s323 = scalar_lea.vmem %s219, 16 [#allocation7]
        %324 = vst.msk [vmem:[%s323] sm:$0xff] %vm318, %v321
        %325 = vst.msk [vmem:[%s323 + $0x8] sm:$0xff] %vm318, %v322
        %v326 = vsub.f32 %v314, %v312
        %v327 = vsub.f32 %v315, %v313
        %s328 = scalar_lea.vmem %s219, 32 [#allocation7]
        %329 = vst.msk [vmem:[%s328] sm:$0xff] %vm318, %v326
        %330 = vst.msk [vmem:[%s328 + $0x8] sm:$0xff] %vm318, %v327
        %v331 = vadd.f32 %v314, %v312
        %v332 = vadd.f32 %v315, %v313
        %s333 = scalar_lea.vmem %s219, 48 [#allocation7]
        %334 = vst.msk [vmem:[%s333] sm:$0xff] %vm318, %v331
        %335 = vst.msk [vmem:[%s333 + $0x8] sm:$0xff] %vm318, %v332
        %s336 = sand.u32 %s100, 1
        %s337 = scalar_lea.sflag [#allocation4], %s336
        %s338 = sand.u32 %s100, 1
        %s339 = smul.addr %s338, 64
        %s340 = scalar_lea.vmem [#allocation7], %s339
        // Predicated region
        $region37: #{tpu_custom_call.1} parent=27 // pred_check
          %p341 = pneg %p110
        $region38: #{tpu_custom_call.1} parent=27 // pred_check_branch
          %343 = sbr.rel (%p341) target = $region40
        $region39: #{tpu_custom_call.1} parent=27 // pred_region
          %s344 = smul.u32 2, %s27
          %s346 = ssub.s32 1024, 1024
          %347 = vsyncadd %s337, %s346
          %s348 = smul.addr %s26, 8
          %s349 = sadd.s32 %s344, %s348
          %s350 = smul.addr %s349, 128
          %s351 = scalar_lea.hbm %s2, %s350
          %s352 = sshll.u32 %s340, 4
          %s353 = int_to_ptr.vmem [resolvable:$true] %s352
          %358 = dma.vmem_to_hbm [thread:$0]  %s353, 1024, %s351, %s337, 128, 128, 8
        $region40: #{tpu_custom_call.1} parent=27 // pred_fallthru
          _
      $region28: #{tpu_custom_call.1} parent=5 // pred_fallthru
        _
      %p359 = scmp.le.s32.totalorder 2, %s17
      // Predicated region
      $region41: #{tpu_custom_call.1} parent=5 // pred_check
        %p360 = pneg %p359
      $region42: #{tpu_custom_call.1} parent=5 // pred_check_branch
        %362 = sbr.rel (%p360) target = $region44
      $region43: #{tpu_custom_call.1} parent=5 // pred_region
        %s363 = ssub.s32 %s17, 2
        // Predicated region
        $region45: #{tpu_custom_call.1} parent=43 // pred_check
          %p364 = pneg %p116
        $region46: #{tpu_custom_call.1} parent=43 // pred_check_branch
          %366 = sbr.rel (%p364) target = $region48
        $region47: #{tpu_custom_call.1} parent=43 // pred_region
          %s367 = sand.u32 %s101, 1
          %s368 = scalar_lea.sflag [#allocation4], %s367
          %s369 = sand.u32 %s101, 1
          %s370 = smul.addr %s369, 64
          %s371 = scalar_lea.vmem [#allocation7], %s370
          %372 = dma.done %s368, 1024
        $region48: #{tpu_custom_call.1} parent=43 // pred_fallthru
          _
      $region44: #{tpu_custom_call.1} parent=5 // pred_fallthru
        _
    $region6: #{tpu_custom_call.1} parent=1 // loop_footer
      %s21 = sadd.s32 1, %s17
    $region7: #{tpu_custom_call.1} parent=1 // loop_footer_branch
      %16 = sbr.rel target = $region3
    $region8: #{tpu_custom_call.1} parent=1 // loop_exit
      _
    %373 = vsyncpa [#allocation3], 1
    %s374 = scalar_lea.sflag [#allocation3], 1
    %375 = vsyncpa %s374, 1
    %376 = vsyncpa [#allocation6], 1
    %s377 = scalar_lea.sflag [#allocation6], 1
    %378 = vsyncpa %s377, 1
    %379 = vsyncpa [#allocation4], 1
    %s380 = scalar_lea.sflag [#allocation4], 1
    %381 = vsyncpa %s380, 1

</llo_original>
